<compile_context>
chip_gen: v7x
topology: tpu7x:2x2x1
jax: 0.10.0
libtpu: 0.0.40
codegen_flags: <defaults>
</compile_context>

<pallas_src>
import jax
import jax.numpy as jnp
import numpy as np
from jax import lax
from jax.experimental import pallas as pl
from jax.experimental.pallas import tpu as pltpu

H_PAD = 128          # per-gate hidden padding (100 -> 128)
E_PAD = 384          # embedding padding (300 -> 384)
ROW_BLOCK = 512      # row tile for the hoisted input projection


def _round_up(n, m):
    return ((n + m - 1) // m) * m


def _pad_to(a, size, axis):
    pad = size - a.shape[axis]
    if pad <= 0:
        return a
    widths = [(0, 0)] * a.ndim
    widths[axis] = (0, pad)
    return jnp.pad(a, widths)


# ---------------------------------------------------------------------------
# Stage 1: hoisted input projection  (one big, 128-aligned, bf16 MXU matmul)
#   out[r, :] = x2d[r, :] @ Wx_all + b_all      Wx_all: (E_pad, 8*H_pad)
# ---------------------------------------------------------------------------
def input_proj_kernel(x_ref, w_ref, b_ref, out_ref):
    out_ref[...] = (
        jnp.dot(x_ref[...], w_ref[...], preferred_element_type=jnp.float32)
        + b_ref[...]
    )


# ---------------------------------------------------------------------------
# Stage 2: fused bidirectional recurrence + FC head.
#   Per step s: fwd processes t=s, rev processes t=T-1-s (independent carries).
#   Pre-activations = precomputed gate slab (x·Wx + b) + h·Wh  (one fused
#   (B,128)x(128,512) bf16 matmul per direction per step).
# ---------------------------------------------------------------------------
def bilstm_recurrence_kernel(lens_ref, xg_f_ref, xg_r_ref,
                             wh_f_ref, wh_r_ref,
                             wfc_f_ref, wfc_r_ref, bfc_ref,
                             out_ref):
    T, B, _ = xg_f_ref.shape
    Hp = wh_f_ref.shape[0]                       # 128
    lens = lens_ref[...]                         # (B, 1) int32

    # Recurrent weights stay resident in vregs/VMEM across all timesteps.
    wh_f = wh_f_ref[...]                         # (128, 512) bf16
    wh_r = wh_r_ref[...]                         # (128, 512) bf16

    def lstm_step(pre, c):
        # pre: (B, 4*Hp) f32 pre-activations, gates at 128-lane boundaries.
        i_g = jax.nn.sigmoid(pre[:, 0 * Hp:1 * Hp])
        f_g = jax.nn.sigmoid(pre[:, 1 * Hp:2 * Hp])
        g_g = jnp.tanh(pre[:, 2 * Hp:3 * Hp])
        o_g = jax.nn.sigmoid(pre[:, 3 * Hp:4 * Hp])
        c_new = f_g * c + i_g * g_g
        h_new = o_g * jnp.tanh(c_new)
        return h_new, c_new

    zeros = jnp.zeros((B, Hp), jnp.float32)

    def body(s, carry):
        h_f, c_f, h_r, c_r = carry
        t_f = s
        t_r = T - 1 - s

        pre_f = xg_f_ref[t_f] + jnp.dot(h_f.astype(jnp.bfloat16), wh_f,
                                        preferred_element_type=jnp.float32)
        pre_r = xg_r_ref[t_r] + jnp.dot(h_r.astype(jnp.bfloat16), wh_r,
                                        preferred_element_type=jnp.float32)

        hf_new, cf_new = lstm_step(pre_f, c_f)
        hr_new, cr_new = lstm_step(pre_r, c_r)

        # Packed-sequence emulation: freeze state for t >= len_b.
        vf = t_f < lens                          # (B, 1), broadcasts over Hp
        vr = t_r < lens
        h_f = jnp.where(vf, hf_new, h_f)
        c_f = jnp.where(vf, cf_new, c_f)
        h_r = jnp.where(vr, hr_new, h_r)
        c_r = jnp.where(vr, cr_new, c_r)
        return h_f, c_f, h_r, c_r

    h_f, _, h_r, _ = lax.fori_loop(0, T, body, (zeros, zeros, zeros, zeros),
                                   unroll=True)

    # fc(cat(h_f, h_r)) with the weight pre-split -> no lane-dim concat.
    # Pad rows of wfc_* are zero, so padded h lanes contribute nothing.
    logits = (jnp.dot(h_f, wfc_f_ref[...], preferred_element_type=jnp.float32)
              + jnp.dot(h_r, wfc_r_ref[...], preferred_element_type=jnp.float32)
              + bfc_ref[...])
    # TODO(synk): nn.Dropout(p=0.25) is identity at inference (eval mode); omitted.
    out_ref[...] = jax.nn.sigmoid(logits)        # torch.squeeze(., 1) is a no-op here


# ---------------------------------------------------------------------------
# Parameter packing: fuse the 4 gates, pad H->128 / E->384, fwd|rev along
# lanes, cast MXU operands to bf16.  Pad columns/rows are zero so the padded
# hidden lanes stay exactly zero through the recurrence.
# ---------------------------------------------------------------------------
def pack_params(p, Hp=H_PAD, Ep=E_PAD):
    def fuse_wx(wx):                       # (4, E, H) -> (Ep, 4*Hp)
        w = _pad_to(wx, Hp, axis=2)                              # (4, E, Hp)
        w = jnp.transpose(w, (1, 0, 2)).reshape(wx.shape[1], 4 * Hp)
        return _pad_to(w, Ep, axis=0)

    def fuse_wh(wh):                       # (4, H, H) -> (Hp, 4*Hp)
        w = _pad_to(wh, Hp, axis=2)
        w = jnp.transpose(w, (1, 0, 2)).reshape(wh.shape[1], 4 * Hp)
        return _pad_to(w, Hp, axis=0)

    def fuse_b(b):                         # (4, 1, H) -> (1, 4*Hp)
        return _pad_to(b, Hp, axis=2).reshape(1, 4 * Hp)

    # NOTE: bias must equal PyTorch's b_ih + b_hh (pre-combined).
    wx_all = jnp.concatenate([fuse_wx(p["wx_f"]), fuse_wx(p["wx_r"])], axis=1)
    b_all = jnp.concatenate([fuse_b(p["b_f"]), fuse_b(p["b_r"])], axis=1)
    return {
        "embedding": p["embedding"],
        "wx": wx_all.astype(jnp.bfloat16),              # (Ep, 8*Hp)
        "b": b_all.astype(jnp.float32),                 # (1, 8*Hp)
        "wh_f": fuse_wh(p["wh_f"]).astype(jnp.bfloat16),  # (Hp, 4*Hp)
        "wh_r": fuse_wh(p["wh_r"]).astype(jnp.bfloat16),
        "wfc_f": _pad_to(p["wfc_f"], Hp, axis=0).astype(jnp.float32),  # (Hp, NL)
        "wfc_r": _pad_to(p["wfc_r"], Hp, axis=0).astype(jnp.float32),
        "b_fc": p["b_fc"].astype(jnp.float32),          # (1, NL)
    }


def bilstm_forward(text, text_len, p):
    """text: (B, T) int32 token ids; text_len: (B,) int32 valid lengths."""
    Hp, Ep = H_PAD, E_PAD
    G = 4 * Hp
    packed = pack_params(p, Hp, Ep)
    B, T = text.shape
    NL = p["b_fc"].shape[-1]

    emb = packed["embedding"][text]                            # (B, T, E) gather = glue
    x = jnp.transpose(emb, (1, 0, 2))                          # time-major (T, B, E)
    x = _pad_to(x, Ep, axis=2).astype(jnp.bfloat16)            # (T, B, Ep) bf16

    # ---- stage 1: one hoisted (T*B, Ep) x (Ep, 8*Hp) projection ----
    R = T * B
    x2d = x.reshape(R, Ep)
    if R <= ROW_BLOCK:
        Rp = _round_up(R, 8)
        rb = Rp
    else:
        Rp = _round_up(R, ROW_BLOCK)
        rb = ROW_BLOCK
    x2d = _pad_to(x2d, Rp, axis=0)

    xg = pl.pallas_call(
        input_proj_kernel,
        out_shape=jax.ShapeDtypeStruct((Rp, 2 * G), jnp.float32),
        grid=(Rp // rb,),
        in_specs=[pl.BlockSpec((rb, Ep), lambda i: (i, 0)),
                  pl.BlockSpec((Ep, 2 * G), lambda i: (0, 0)),
                  pl.BlockSpec((1, 2 * G), lambda i: (0, 0))],
        out_specs=pl.BlockSpec((rb, 2 * G), lambda i: (i, 0)),
        compiler_params=pltpu.CompilerParams(
            dimension_semantics=("parallel",)),
    )(x2d, packed["wx"], packed["b"])

    xg = xg[:R].reshape(T, B, 2 * G)
    xg_f = xg[..., :G]                                          # (T, B, 4*Hp)
    xg_r = xg[..., G:]                                          # (T, B, 4*Hp)

    lens = text_len.astype(jnp.int32).reshape(B, 1)

    # ---- stage 2: fused fwd+rev recurrence + FC head ----
    vmem = pl.BlockSpec(memory_space=pltpu.MemorySpace.VMEM)
    return pl.pallas_call(
        bilstm_recurrence_kernel,
        out_shape=jax.ShapeDtypeStruct((B, NL), jnp.float32),
        in_specs=[vmem] * 8,
        out_specs=vmem,
    )(lens, xg_f, xg_r,
      packed["wh_f"], packed["wh_r"],
      packed["wfc_f"], packed["wfc_r"], packed["b_fc"])


def ref_forward(text, text_len, p):
    """Pure-JAX f32 reference of the same forward pass (validation only)."""
    emb = p["embedding"][text].astype(jnp.float32)
    B, T, _ = emb.shape
    H = p["wh_f"].shape[-1]
    lens = text_len.astype(jnp.int32).reshape(B, 1)

    def cell(x_t, h, c, wx, wh, b):
        i = jax.nn.sigmoid(x_t @ wx[0] + h @ wh[0] + b[0])
        f = jax.nn.sigmoid(x_t @ wx[1] + h @ wh[1] + b[1])
        g = jnp.tanh(x_t @ wx[2] + h @ wh[2] + b[2])
        o = jax.nn.sigmoid(x_t @ wx[3] + h @ wh[3] + b[3])
        c = f * c + i * g
        return o * jnp.tanh(c), c

    h = c = jnp.zeros((B, H), jnp.float32)
    for t in range(T):
        hn, cn = cell(emb[:, t], h, c, p["wx_f"], p["wh_f"], p["b_f"])
        valid = t < lens
        h, c = jnp.where(valid, hn, h), jnp.where(valid, cn, c)
    h_f = h
    h = c = jnp.zeros((B, H), jnp.float32)
    for t in range(T - 1, -1, -1):
        hn, cn = cell(emb[:, t], h, c, p["wx_r"], p["wh_r"], p["b_r"])
        valid = t < lens
        h, c = jnp.where(valid, hn, h), jnp.where(valid, cn, c)
    h_r = h
    return jax.nn.sigmoid(h_f @ p["wfc_f"] + h_r @ p["wfc_r"] + p["b_fc"])


def init_params(key, vocab=50, E=300, H=100, NL=4):
    ks = jax.random.split(key, 12)
    s_ih = 1.0 / np.sqrt(H)
    u = lambda k, shape, s: jax.random.uniform(k, shape, jnp.float32, -s, s)
    return {
        "embedding": jax.random.normal(ks[0], (vocab, E), jnp.float32) * 0.1,
        "wx_f": u(ks[1], (4, E, H), s_ih),
        "wh_f": u(ks[2], (4, H, H), s_ih),
        "b_f":  u(ks[3], (4, 1, H), s_ih),     # = b_ih + b_hh (combined)
        "wx_r": u(ks[4], (4, E, H), s_ih),
        "wh_r": u(ks[5], (4, H, H), s_ih),
        "b_r":  u(ks[6], (4, 1, H), s_ih),
        "wfc_f": u(ks[7], (H, NL), 1.0 / np.sqrt(2 * H)),
        "wfc_r": u(ks[8], (H, NL), 1.0 / np.sqrt(2 * H)),
        "b_fc":  u(ks[9], (1, NL), 1.0 / np.sqrt(2 * H)),
    }


if __name__ == "__main__":
    B, T, vocab, E, H, NL = 2, 8, 50, 300, 100, 4

    key = jax.random.PRNGKey(0)
    kp, kt = jax.random.split(key)
    params = init_params(kp, vocab=vocab, E=E, H=H, NL=NL)

    text = jax.random.randint(kt, (B, T), 0, vocab, dtype=jnp.int32)
    text_len = jnp.array([T, 5], dtype=jnp.int32)   # ragged lengths (packed-seq path)

    out = jax.block_until_ready(bilstm_forward(text, text_len, params))
    ref = jax.block_until_ready(ref_forward(text, text_len, params))

    assert out.shape == (B, NL), out.shape
    np.testing.assert_allclose(np.asarray(out), np.asarray(ref), atol=1e-2, rtol=1e-2)
    print("KERNEL_OK")
</pallas_src>

<mosaic_0001>
module attributes {stable_mosaic.version = 11 : i64} {
  func.func @input_proj_kernel(%arg0: i32, %arg1: memref<16x384xbf16, #tpu.memory_space<vmem>>, %arg2: memref<384x1024xbf16, #tpu.memory_space<vmem>>, %arg3: memref<1x1024xf32, #tpu.memory_space<vmem>>, %arg4: memref<16x1024xf32, #tpu.memory_space<vmem>>) attributes {dimension_semantics = [#tpu.dimension_semantics<parallel>], iteration_bounds = array<i64: 1>, scalar_prefetch = 0 : i64, scratch_operands = 0 : i64, tpu.core_type = #tpu.core_type<tc>, window_params = [{transform_indices = @transform_0, window_bounds = array<i64: 16, 384>}, {pipeline_mode = #tpu.pipeline_mode<synchronous>, transform_indices = @transform_1, window_bounds = array<i64: 384, 1024>}, {pipeline_mode = #tpu.pipeline_mode<synchronous>, transform_indices = @transform_2, window_bounds = array<i64: 1, 1024>}, {transform_indices = @transform_3, window_bounds = array<i64: 16, 1024>}]} {
    %c0 = arith.constant 0 : index
    %c0_0 = arith.constant 0 : index
    %0 = vector.load %arg1[%c0, %c0_0] : memref<16x384xbf16, #tpu.memory_space<vmem>>, vector<16x384xbf16>
    %c0_1 = arith.constant 0 : index
    %c0_2 = arith.constant 0 : index
    %1 = vector.load %arg2[%c0_1, %c0_2] : memref<384x1024xbf16, #tpu.memory_space<vmem>>, vector<384x1024xbf16>
    %cst = arith.constant dense<0.000000e+00> : vector<16x1024xf32>
    %2 = tpu.matmul %0, %1, %cst {dimension_numbers = #tpu.dot_dimension_numbers<[1], [0], [0], [1], [0, 0, 1, 1], [], []>} : vector<16x384xbf16>, vector<384x1024xbf16>, vector<16x1024xf32> -> vector<16x1024xf32>
    %c0_3 = arith.constant 0 : index
    %c0_4 = arith.constant 0 : index
    %3 = vector.load %arg3[%c0_3, %c0_4] : memref<1x1024xf32, #tpu.memory_space<vmem>>, vector<1x1024xf32>
    %4 = vector.broadcast %3 : vector<1x1024xf32> to vector<16x1024xf32>
    %5 = arith.addf %2, %4 : vector<16x1024xf32>
    %c0_5 = arith.constant 0 : index
    %c0_6 = arith.constant 0 : index
    %6 = vector.load %arg4[%c0_5, %c0_6] : memref<16x1024xf32, #tpu.memory_space<vmem>>, vector<16x1024xf32>
    tpu.vector_store %arg4[%c0_5, %c0_6], %5 {strides = array<i32>} : memref<16x1024xf32, #tpu.memory_space<vmem>>, vector<16x1024xf32>,
    return
  }
  func.func @transform_0(%arg0: i32) -> (i32, i32) {
    %c0_i32 = arith.constant 0 : i32
    %c0_i32_0 = arith.constant 0 : i32
    return %arg0, %c0_i32 : i32, i32
  }
  func.func @transform_1(%arg0: i32) -> (i32, i32) {
    %c0_i32 = arith.constant 0 : i32
    %c0_i32_0 = arith.constant 0 : i32
    %c0_i32_1 = arith.constant 0 : i32
    return %c0_i32, %c0_i32_0 : i32, i32
  }
  func.func @transform_2(%arg0: i32) -> (i32, i32) {
    %c0_i32 = arith.constant 0 : i32
    %c0_i32_0 = arith.constant 0 : i32
    %c0_i32_1 = arith.constant 0 : i32
    return %c0_i32, %c0_i32_0 : i32, i32
  }
  func.func @transform_3(%arg0: i32) -> (i32, i32) {
    %c0_i32 = arith.constant 0 : i32
    %c0_i32_0 = arith.constant 0 : i32
    return %arg0, %c0_i32 : i32, i32
  }
}

</mosaic_0001>

<llo_original>
// kernel: tpu_custom_call.1
$region0: #{tpu_custom_call.1}
  #allocation0 [shape = 'u32[]', space=smem, size = 0x4, offset = 0x4, fixed_abs, tag = 'smem constant byte address 0x4 - core index']
  #allocation1 [shape = 'u32[144,128]{1,0:T(1,128)}', space=vmem, size = 0x12000, scoped, tag = 'internal scratch']
  %s0 = inlined_call_operand.hbm [shape: bf16[16,384], index: 0, kind: input, shape index: {}]
  %s1 = inlined_call_operand.hbm [shape: bf16[384,1024], index: 1, kind: input, shape index: {}]
  %s2 = inlined_call_operand.hbm [shape: f32[1,1024], index: 2, kind: input, shape index: {}]
  %s3 = inlined_call_operand.hbm [shape: f32[16,1024], index: 3, kind: output, shape index: {}]
  %s4 = sld [smem:[#allocation0]]
  $region34: #{tpu_custom_call.1} parent=0
    _
  %s6 = ssub.s32 1, %s4
  %s7 = scalar_select 0, %s6, %s4
  $region1: #{tpu_custom_call.1} parent=0
    #allocation2 [shape = 'u8[12288]{0}', space=vmem, size = 0x3000, scoped, tag = 'input window, operand 0, single buffered']
    #allocation3 [shape = 's32[1]{0}', space=sflag, size = 0x4, scoped, tag = 'scoped memory for tpu_custom_call.1']
    #allocation4 [shape = 's32[1]{0}', space=sflag, size = 0x4, scoped, tag = 'scoped memory for tpu_custom_call.1']
    #allocation5 [shape = 'u8[786432]{0}', space=vmem, size = 0xc0000, scoped, tag = 'input window, operand 1, single buffered']
    #allocation6 [shape = 's32[1]{0}', space=sflag, size = 0x4, scoped, tag = 'scoped memory for tpu_custom_call.1']
    #allocation7 [shape = 'u8[4096]{0}', space=vmem, size = 0x1000, scoped, tag = 'input window, operand 2, single buffered']
    #allocation8 [shape = 'u8[65536]{0}', space=vmem, size = 0x10000, scoped, tag = 'output window, operand 0, single buffered']
    %8 = vsyncpa [#allocation3], 0
    %9 = vsyncpa [#allocation6], 0
    %10 = vsyncpa [#allocation4], 0
    // Predicated region
    $region2: #{tpu_custom_call.1} parent=1 // pred_check
      _
    $region3: #{tpu_custom_call.1} parent=1 // pred_check_branch
      %12 = sbr.rel (0) target = $region5
    $region4: #{tpu_custom_call.1} parent=1 // pred_region
      %s14 = ssub.s32 384, 384
      %15 = vsyncadd [#allocation3], %s14
      %s16 = sshll.u32 [#allocation2], 4
      %s17 = int_to_ptr.vmem [resolvable:$true] %s16
      %22 = dma.hbm_to_vmem [thread:$0]  %s0, 384, %s17, [#allocation3], 192, 192, 12
    $region5: #{tpu_custom_call.1} parent=1 // pred_fallthru
      _
    // Predicated region
    $region6: #{tpu_custom_call.1} parent=1 // pred_check
      _
    $region7: #{tpu_custom_call.1} parent=1 // pred_check_branch
      %24 = sbr.rel (0) target = $region9
    $region8: #{tpu_custom_call.1} parent=1 // pred_region
      %s26 = ssub.s32 24576, 24576
      %27 = vsyncadd [#allocation6], %s26
      %s28 = sshll.u32 [#allocation5], 4
      %s29 = int_to_ptr.vmem [resolvable:$true] %s28
      %34 = dma.hbm_to_vmem [thread:$0]  %s1, 24576, %s29, [#allocation6], 512, 512, 32
    $region9: #{tpu_custom_call.1} parent=1 // pred_fallthru
      _
    // Predicated region
    $region10: #{tpu_custom_call.1} parent=1 // pred_check
      _
    $region11: #{tpu_custom_call.1} parent=1 // pred_check_branch
      %36 = sbr.rel (0) target = $region13
    $region12: #{tpu_custom_call.1} parent=1 // pred_region
      %s38 = ssub.s32 128, 128
      %39 = vsyncadd [#allocation6], %s38
      %s41 = sshll.u32 [#allocation7], 4
      %s42 = int_to_ptr.vmem [resolvable:$true] %s41
      %44 = dma.hbm_to_vmem [thread:$0]  %s2, 128, %s42, [#allocation6]
    $region13: #{tpu_custom_call.1} parent=1 // pred_fallthru
      _
    // Predicated region
    $region14: #{tpu_custom_call.1} parent=1 // pred_check
      _
    $region15: #{tpu_custom_call.1} parent=1 // pred_check_branch
      %46 = sbr.rel (0) target = $region17
    $region16: #{tpu_custom_call.1} parent=1 // pred_region
      %47 = dma.done [#allocation3], 384
    $region17: #{tpu_custom_call.1} parent=1 // pred_fallthru
      _
    // Predicated region
    $region18: #{tpu_custom_call.1} parent=1 // pred_check
      _
    $region19: #{tpu_custom_call.1} parent=1 // pred_check_branch
      %49 = sbr.rel (0) target = $region21
    $region20: #{tpu_custom_call.1} parent=1 // pred_region
      %50 = dma.done [#allocation6], 24576
    $region21: #{tpu_custom_call.1} parent=1 // pred_fallthru
      _
    // Predicated region
    $region22: #{tpu_custom_call.1} parent=1 // pred_check
      _
    $region23: #{tpu_custom_call.1} parent=1 // pred_check_branch
      %52 = sbr.rel (0) target = $region25
    $region24: #{tpu_custom_call.1} parent=1 // pred_region
      %53 = dma.done [#allocation6], 128
    $region25: #{tpu_custom_call.1} parent=1 // pred_fallthru
      _
    %v55 = vld [vmem:[#allocation2] sm:$0xff]
    %v56 = vld [vmem:[#allocation2 + $0x8] sm:$0xf]
    %v57 = vld [vmem:[#allocation2 + $0xc] sm:$0xff]
    %v58 = vld [vmem:[#allocation2 + $0x14] sm:$0xf]
    %v59 = vld [vmem:[#allocation5] sm:$0xff]
    %v60 = vld [vmem:[#allocation5 + $0x8] sm:$0xff]
    %v61 = vld [vmem:[#allocation5 + $0x10] sm:$0xff]
    %v62 = vld [vmem:[#allocation5 + $0x18] sm:$0xff]
    %v63 = vld [vmem:[#allocation5 + $0x20] sm:$0xff]
    %v64 = vld [vmem:[#allocation5 + $0x28] sm:$0xff]
    %v65 = vld [vmem:[#allocation5 + $0x30] sm:$0xff]
    %v66 = vld [vmem:[#allocation5 + $0x38] sm:$0xff]
    %v67 = vld [vmem:[#allocation5 + $0x40] sm:$0xff]
    %v68 = vld [vmem:[#allocation5 + $0x48] sm:$0xff]
    %v69 = vld [vmem:[#allocation5 + $0x50] sm:$0xff]
    %v70 = vld [vmem:[#allocation5 + $0x58] sm:$0xff]
    %v71 = vld [vmem:[#allocation5 + $0x60] sm:$0xff]
    %v72 = vld [vmem:[#allocation5 + $0x68] sm:$0xff]
    %v73 = vld [vmem:[#allocation5 + $0x70] sm:$0xff]
    %v74 = vld [vmem:[#allocation5 + $0x78] sm:$0xff]
    %v75 = vld [vmem:[#allocation5 + $0x80] sm:$0xff]
    %v76 = vld [vmem:[#allocation5 + $0x88] sm:$0xff]
    %v77 = vld [vmem:[#allocation5 + $0x90] sm:$0xff]
    %v78 = vld [vmem:[#allocation5 + $0x98] sm:$0xff]
    %v79 = vld [vmem:[#allocation5 + $0xa0] sm:$0xff]
    %v80 = vld [vmem:[#allocation5 + $0xa8] sm:$0xff]
    %v81 = vld [vmem:[#allocation5 + $0xb0] sm:$0xff]
    %v82 = vld [vmem:[#allocation5 + $0xb8] sm:$0xff]
    %v83 = vld [vmem:[#allocation5 + $0xc0] sm:$0xff]
    %v84 = vld [vmem:[#allocation5 + $0xc8] sm:$0xff]
    %v85 = vld [vmem:[#allocation5 + $0xd0] sm:$0xff]
    %v86 = vld [vmem:[#allocation5 + $0xd8] sm:$0xff]
    %v87 = vld [vmem:[#allocation5 + $0xe0] sm:$0xff]
    %v88 = vld [vmem:[#allocation5 + $0xe8] sm:$0xff]
    %v89 = vld [vmem:[#allocation5 + $0xf0] sm:$0xff]
    %v90 = vld [vmem:[#allocation5 + $0xf8] sm:$0xff]
    %v91 = vld [vmem:[#allocation5 + $0x100] sm:$0xff]
    %v92 = vld [vmem:[#allocation5 + $0x108] sm:$0xff]
    %v93 = vld [vmem:[#allocation5 + $0x110] sm:$0xff]
    %v94 = vld [vmem:[#allocation5 + $0x118] sm:$0xff]
    %v95 = vld [vmem:[#allocation5 + $0x120] sm:$0xff]
    %v96 = vld [vmem:[#allocation5 + $0x128] sm:$0xff]
    %v97 = vld [vmem:[#allocation5 + $0x130] sm:$0xff]
    %v98 = vld [vmem:[#allocation5 + $0x138] sm:$0xff]
    %v99 = vld [vmem:[#allocation5 + $0x140] sm:$0xff]
    %v100 = vld [vmem:[#allocation5 + $0x148] sm:$0xff]
    %v101 = vld [vmem:[#allocation5 + $0x150] sm:$0xff]
    %v102 = vld [vmem:[#allocation5 + $0x158] sm:$0xff]
    %v103 = vld [vmem:[#allocation5 + $0x160] sm:$0xff]
    %v104 = vld [vmem:[#allocation5 + $0x168] sm:$0xff]
    %v105 = vld [vmem:[#allocation5 + $0x170] sm:$0xff]
    %v106 = vld [vmem:[#allocation5 + $0x178] sm:$0xff]
    %v107 = vld [vmem:[#allocation5 + $0x180] sm:$0xff]
    %v108 = vld [vmem:[#allocation5 + $0x188] sm:$0xff]
    %v109 = vld [vmem:[#allocation5 + $0x190] sm:$0xff]
    %v110 = vld [vmem:[#allocation5 + $0x198] sm:$0xff]
    %v111 = vld [vmem:[#allocation5 + $0x1a0] sm:$0xff]
    %v112 = vld [vmem:[#allocation5 + $0x1a8] sm:$0xff]
    %v113 = vld [vmem:[#allocation5 + $0x1b0] sm:$0xff]
    %v114 = vld [vmem:[#allocation5 + $0x1b8] sm:$0xff]
    %v115 = vld [vmem:[#allocation5 + $0x1c0] sm:$0xff]
    %v116 = vld [vmem:[#allocation5 + $0x1c8] sm:$0xff]
    %v117 = vld [vmem:[#allocation5 + $0x1d0] sm:$0xff]
    %v118 = vld [vmem:[#allocation5 + $0x1d8] sm:$0xff]
    %v119 = vld [vmem:[#allocation5 + $0x1e0] sm:$0xff]
    %v120 = vld [vmem:[#allocation5 + $0x1e8] sm:$0xff]
    %v121 = vld [vmem:[#allocation5 + $0x1f0] sm:$0xff]
    %v122 = vld [vmem:[#allocation5 + $0x1f8] sm:$0xff]
    %v123 = vld [vmem:[#allocation5 + $0x200] sm:$0xff]
    %v124 = vld [vmem:[#allocation5 + $0x208] sm:$0xff]
    %v125 = vld [vmem:[#allocation5 + $0x210] sm:$0xff]
    %v126 = vld [vmem:[#allocation5 + $0x218] sm:$0xff]
    %v127 = vld [vmem:[#allocation5 + $0x220] sm:$0xff]
    %v128 = vld [vmem:[#allocation5 + $0x228] sm:$0xff]
    %v129 = vld [vmem:[#allocation5 + $0x230] sm:$0xff]
    %v130 = vld [vmem:[#allocation5 + $0x238] sm:$0xff]
    %v131 = vld [vmem:[#allocation5 + $0x240] sm:$0xff]
    %v132 = vld [vmem:[#allocation5 + $0x248] sm:$0xff]
    %v133 = vld [vmem:[#allocation5 + $0x250] sm:$0xff]
    %v134 = vld [vmem:[#allocation5 + $0x258] sm:$0xff]
    %v135 = vld [vmem:[#allocation5 + $0x260] sm:$0xff]
    %v136 = vld [vmem:[#allocation5 + $0x268] sm:$0xff]
    %v137 = vld [vmem:[#allocation5 + $0x270] sm:$0xff]
    %v138 = vld [vmem:[#allocation5 + $0x278] sm:$0xff]
    %v139 = vld [vmem:[#allocation5 + $0x280] sm:$0xff]
    %v140 = vld [vmem:[#allocation5 + $0x288] sm:$0xff]
    %v141 = vld [vmem:[#allocation5 + $0x290] sm:$0xff]
    %v142 = vld [vmem:[#allocation5 + $0x298] sm:$0xff]
    %v143 = vld [vmem:[#allocation5 + $0x2a0] sm:$0xff]
    %v144 = vld [vmem:[#allocation5 + $0x2a8] sm:$0xff]
    %v145 = vld [vmem:[#allocation5 + $0x2b0] sm:$0xff]
    %v146 = vld [vmem:[#allocation5 + $0x2b8] sm:$0xff]
    %v147 = vld [vmem:[#allocation5 + $0x2c0] sm:$0xff]
    %v148 = vld [vmem:[#allocation5 + $0x2c8] sm:$0xff]
    %v149 = vld [vmem:[#allocation5 + $0x2d0] sm:$0xff]
    %v150 = vld [vmem:[#allocation5 + $0x2d8] sm:$0xff]
    %v151 = vld [vmem:[#allocation5 + $0x2e0] sm:$0xff]
    %v152 = vld [vmem:[#allocation5 + $0x2e8] sm:$0xff]
    %v153 = vld [vmem:[#allocation5 + $0x2f0] sm:$0xff]
    %v154 = vld [vmem:[#allocation5 + $0x2f8] sm:$0xff]
    %v155 = vld [vmem:[#allocation5 + $0x300] sm:$0xff]
    %v156 = vld [vmem:[#allocation5 + $0x308] sm:$0xff]
    %v157 = vld [vmem:[#allocation5 + $0x310] sm:$0xff]
    %v158 = vld [vmem:[#allocation5 + $0x318] sm:$0xff]
    %v159 = vld [vmem:[#allocation5 + $0x320] sm:$0xff]
    %v160 = vld [vmem:[#allocation5 + $0x328] sm:$0xff]
    %v161 = vld [vmem:[#allocation5 + $0x330] sm:$0xff]
    %v162 = vld [vmem:[#allocation5 + $0x338] sm:$0xff]
    %v163 = vld [vmem:[#allocation5 + $0x340] sm:$0xff]
    %v164 = vld [vmem:[#allocation5 + $0x348] sm:$0xff]
    %v165 = vld [vmem:[#allocation5 + $0x350] sm:$0xff]
    %v166 = vld [vmem:[#allocation5 + $0x358] sm:$0xff]
    %v167 = vld [vmem:[#allocation5 + $0x360] sm:$0xff]
    %v168 = vld [vmem:[#allocation5 + $0x368] sm:$0xff]
    %v169 = vld [vmem:[#allocation5 + $0x370] sm:$0xff]
    %v170 = vld [vmem:[#allocation5 + $0x378] sm:$0xff]
    %v171 = vld [vmem:[#allocation5 + $0x380] sm:$0xff]
    %v172 = vld [vmem:[#allocation5 + $0x388] sm:$0xff]
    %v173 = vld [vmem:[#allocation5 + $0x390] sm:$0xff]
    %v174 = vld [vmem:[#allocation5 + $0x398] sm:$0xff]
    %v175 = vld [vmem:[#allocation5 + $0x3a0] sm:$0xff]
    %v176 = vld [vmem:[#allocation5 + $0x3a8] sm:$0xff]
    %v177 = vld [vmem:[#allocation5 + $0x3b0] sm:$0xff]
    %v178 = vld [vmem:[#allocation5 + $0x3b8] sm:$0xff]
    %v179 = vld [vmem:[#allocation5 + $0x3c0] sm:$0xff]
    %v180 = vld [vmem:[#allocation5 + $0x3c8] sm:$0xff]
    %v181 = vld [vmem:[#allocation5 + $0x3d0] sm:$0xff]
    %v182 = vld [vmem:[#allocation5 + $0x3d8] sm:$0xff]
    %v183 = vld [vmem:[#allocation5 + $0x3e0] sm:$0xff]
    %v184 = vld [vmem:[#allocation5 + $0x3e8] sm:$0xff]
    %v185 = vld [vmem:[#allocation5 + $0x3f0] sm:$0xff]
    %v186 = vld [vmem:[#allocation5 + $0x3f8] sm:$0xff]
    %v187 = vld [vmem:[#allocation5 + $0x400] sm:$0xff]
    %v188 = vld [vmem:[#allocation5 + $0x408] sm:$0xff]
    %v189 = vld [vmem:[#allocation5 + $0x410] sm:$0xff]
    %v190 = vld [vmem:[#allocation5 + $0x418] sm:$0xff]
    %v191 = vld [vmem:[#allocation5 + $0x420] sm:$0xff]
    %v192 = vld [vmem:[#allocation5 + $0x428] sm:$0xff]
    %v193 = vld [vmem:[#allocation5 + $0x430] sm:$0xff]
    %v194 = vld [vmem:[#allocation5 + $0x438] sm:$0xff]
    %v195 = vld [vmem:[#allocation5 + $0x440] sm:$0xff]
    %v196 = vld [vmem:[#allocation5 + $0x448] sm:$0xff]
    %v197 = vld [vmem:[#allocation5 + $0x450] sm:$0xff]
    %v198 = vld [vmem:[#allocation5 + $0x458] sm:$0xff]
    %v199 = vld [vmem:[#allocation5 + $0x460] sm:$0xff]
    %v200 = vld [vmem:[#allocation5 + $0x468] sm:$0xff]
    %v201 = vld [vmem:[#allocation5 + $0x470] sm:$0xff]
    %v202 = vld [vmem:[#allocation5 + $0x478] sm:$0xff]
    %v203 = vld [vmem:[#allocation5 + $0x480] sm:$0xff]
    %v204 = vld [vmem:[#allocation5 + $0x488] sm:$0xff]
    %v205 = vld [vmem:[#allocation5 + $0x490] sm:$0xff]
    %v206 = vld [vmem:[#allocation5 + $0x498] sm:$0xff]
    %v207 = vld [vmem:[#allocation5 + $0x4a0] sm:$0xff]
    %v208 = vld [vmem:[#allocation5 + $0x4a8] sm:$0xff]
    %v209 = vld [vmem:[#allocation5 + $0x4b0] sm:$0xff]
    %v210 = vld [vmem:[#allocation5 + $0x4b8] sm:$0xff]
    %v211 = vld [vmem:[#allocation5 + $0x4c0] sm:$0xff]
    %v212 = vld [vmem:[#allocation5 + $0x4c8] sm:$0xff]
    %v213 = vld [vmem:[#allocation5 + $0x4d0] sm:$0xff]
    %v214 = vld [vmem:[#allocation5 + $0x4d8] sm:$0xff]
    %v215 = vld [vmem:[#allocation5 + $0x4e0] sm:$0xff]
    %v216 = vld [vmem:[#allocation5 + $0x4e8] sm:$0xff]
    %v217 = vld [vmem:[#allocation5 + $0x4f0] sm:$0xff]
    %v218 = vld [vmem:[#allocation5 + $0x4f8] sm:$0xff]
    %v219 = vld [vmem:[#allocation5 + $0x500] sm:$0xff]
    %v220 = vld [vmem:[#allocation5 + $0x508] sm:$0xff]
    %v221 = vld [vmem:[#allocation5 + $0x510] sm:$0xff]
    %v222 = vld [vmem:[#allocation5 + $0x518] sm:$0xff]
    %v223 = vld [vmem:[#allocation5 + $0x520] sm:$0xff]
    %v224 = vld [vmem:[#allocation5 + $0x528] sm:$0xff]
    %v225 = vld [vmem:[#allocation5 + $0x530] sm:$0xff]
    %v226 = vld [vmem:[#allocation5 + $0x538] sm:$0xff]
    %v227 = vld [vmem:[#allocation5 + $0x540] sm:$0xff]
    %v228 = vld [vmem:[#allocation5 + $0x548] sm:$0xff]
    %v229 = vld [vmem:[#allocation5 + $0x550] sm:$0xff]
    %v230 = vld [vmem:[#allocation5 + $0x558] sm:$0xff]
    %v231 = vld [vmem:[#allocation5 + $0x560] sm:$0xff]
    %v232 = vld [vmem:[#allocation5 + $0x568] sm:$0xff]
    %v233 = vld [vmem:[#allocation5 + $0x570] sm:$0xff]
    %v234 = vld [vmem:[#allocation5 + $0x578] sm:$0xff]
    %v235 = vld [vmem:[#allocation5 + $0x580] sm:$0xff]
    %v236 = vld [vmem:[#allocation5 + $0x588] sm:$0xff]
    %v237 = vld [vmem:[#allocation5 + $0x590] sm:$0xff]
    %v238 = vld [vmem:[#allocation5 + $0x598] sm:$0xff]
    %v239 = vld [vmem:[#allocation5 + $0x5a0] sm:$0xff]
    %v240 = vld [vmem:[#allocation5 + $0x5a8] sm:$0xff]
    %v241 = vld [vmem:[#allocation5 + $0x5b0] sm:$0xff]
    %v242 = vld [vmem:[#allocation5 + $0x5b8] sm:$0xff]
    %v243 = vld [vmem:[#allocation5 + $0x5c0] sm:$0xff]
    %v244 = vld [vmem:[#allocation5 + $0x5c8] sm:$0xff]
    %v245 = vld [vmem:[#allocation5 + $0x5d0] sm:$0xff]
    %v246 = vld [vmem:[#allocation5 + $0x5d8] sm:$0xff]
    %v247 = vld [vmem:[#allocation5 + $0x5e0] sm:$0xff]
    %v248 = vld [vmem:[#allocation5 + $0x5e8] sm:$0xff]
    %v249 = vld [vmem:[#allocation5 + $0x5f0] sm:$0xff]
    %v250 = vld [vmem:[#allocation5 + $0x5f8] sm:$0xff]
    %v251 = vld [vmem:[#allocation7] sm:$0xff]
    %v253 = vlaneseq
    %v254 = vshrl.u32 %v253, 7
    %v255 = vsub.s32 0, %v254
    %v256 = vrot.slane %v251, %v255
    %v257 = vlaneseq
    %v258 = vshrl.u32 %v257, 7
    %v259 = vsub.s32 1, %v258
    %v260 = vrot.slane %v251, %v259
    %v261 = vlaneseq
    %v262 = vshrl.u32 %v261, 7
    %v263 = vsub.s32 2, %v262
    %v264 = vrot.slane %v251, %v263
    %v265 = vlaneseq
    %v266 = vshrl.u32 %v265, 7
    %v267 = vsub.s32 3, %v266
    %v268 = vrot.slane %v251, %v267
    %v269 = vlaneseq
    %v270 = vshrl.u32 %v269, 7
    %v271 = vsub.s32 4, %v270
    %v272 = vrot.slane %v251, %v271
    %v273 = vlaneseq
    %v274 = vshrl.u32 %v273, 7
    %v275 = vsub.s32 5, %v274
    %v276 = vrot.slane %v251, %v275
    %v277 = vlaneseq
    %v278 = vshrl.u32 %v277, 7
    %v279 = vsub.s32 6, %v278
    %v280 = vrot.slane %v251, %v279
    %v281 = vlaneseq
    %v282 = vshrl.u32 %v281, 7
    %v283 = vsub.s32 7, %v282
    %v284 = vrot.slane %v251, %v283
    %v297 = vunpack.c.l.b16 %v55
    %v298 = vunpack.c.h.b16 %v55
    %v299 = vunpack.c.l.b16 %v56
    %v300 = vunpack.c.l.b16 %v57
    %v301 = vunpack.c.h.b16 %v57
    %v302 = vunpack.c.l.b16 %v58
    %v303 = vpack.c.b16 %v300, %v297
    %v304 = vpack.c.b16 %v301, %v298
    %v305 = vpack.c.b16 %v302, %v299
    %v501 = vunpack.c.l.b16 %v59
    %v502 = vunpack.c.h.b16 %v59
    %v503 = vunpack.c.l.b16 %v60
    %v504 = vunpack.c.h.b16 %v60
    %v505 = vunpack.c.l.b16 %v61
    %v506 = vunpack.c.h.b16 %v61
    %v507 = vunpack.c.l.b16 %v62
    %v508 = vunpack.c.h.b16 %v62
    %v509 = vunpack.c.l.b16 %v63
    %v510 = vunpack.c.h.b16 %v63
    %v511 = vunpack.c.l.b16 %v64
    %v512 = vunpack.c.h.b16 %v64
    %v513 = vunpack.c.l.b16 %v65
    %v514 = vunpack.c.h.b16 %v65
    %v515 = vunpack.c.l.b16 %v66
    %v516 = vunpack.c.h.b16 %v66
    %v517 = vunpack.c.l.b16 %v67
    %v518 = vunpack.c.h.b16 %v67
    %v519 = vunpack.c.l.b16 %v68
    %v520 = vunpack.c.h.b16 %v68
    %v521 = vunpack.c.l.b16 %v69
    %v522 = vunpack.c.h.b16 %v69
    %v523 = vunpack.c.l.b16 %v70
    %v524 = vunpack.c.h.b16 %v70
    %v525 = vunpack.c.l.b16 %v71
    %v526 = vunpack.c.h.b16 %v71
    %v527 = vunpack.c.l.b16 %v72
    %v528 = vunpack.c.h.b16 %v72
    %v529 = vunpack.c.l.b16 %v73
    %v530 = vunpack.c.h.b16 %v73
    %v531 = vunpack.c.l.b16 %v74
    %v532 = vunpack.c.h.b16 %v74
    %v533 = vunpack.c.l.b16 %v75
    %v534 = vunpack.c.h.b16 %v75
    %v535 = vunpack.c.l.b16 %v76
    %v536 = vunpack.c.h.b16 %v76
    %v537 = vunpack.c.l.b16 %v77
    %v538 = vunpack.c.h.b16 %v77
    %v539 = vunpack.c.l.b16 %v78
    %v540 = vunpack.c.h.b16 %v78
    %v541 = vunpack.c.l.b16 %v79
    %v542 = vunpack.c.h.b16 %v79
    %v543 = vunpack.c.l.b16 %v80
    %v544 = vunpack.c.h.b16 %v80
    %v545 = vunpack.c.l.b16 %v81
    %v546 = vunpack.c.h.b16 %v81
    %v547 = vunpack.c.l.b16 %v82
    %v548 = vunpack.c.h.b16 %v82
    %v549 = vunpack.c.l.b16 %v83
    %v550 = vunpack.c.h.b16 %v83
    %v551 = vunpack.c.l.b16 %v84
    %v552 = vunpack.c.h.b16 %v84
    %v553 = vunpack.c.l.b16 %v85
    %v554 = vunpack.c.h.b16 %v85
    %v555 = vunpack.c.l.b16 %v86
    %v556 = vunpack.c.h.b16 %v86
    %v557 = vunpack.c.l.b16 %v87
    %v558 = vunpack.c.h.b16 %v87
    %v559 = vunpack.c.l.b16 %v88
    %v560 = vunpack.c.h.b16 %v88
    %v561 = vunpack.c.l.b16 %v89
    %v562 = vunpack.c.h.b16 %v89
    %v563 = vunpack.c.l.b16 %v90
    %v564 = vunpack.c.h.b16 %v90
    %v565 = vunpack.c.l.b16 %v91
    %v566 = vunpack.c.h.b16 %v91
    %v567 = vunpack.c.l.b16 %v92
    %v568 = vunpack.c.h.b16 %v92
    %v569 = vunpack.c.l.b16 %v93
    %v570 = vunpack.c.h.b16 %v93
    %v571 = vunpack.c.l.b16 %v94
    %v572 = vunpack.c.h.b16 %v94
    %v573 = vunpack.c.l.b16 %v95
    %v574 = vunpack.c.h.b16 %v95
    %v575 = vunpack.c.l.b16 %v96
    %v576 = vunpack.c.h.b16 %v96
    %v577 = vunpack.c.l.b16 %v97
    %v578 = vunpack.c.h.b16 %v97
    %v579 = vunpack.c.l.b16 %v98
    %v580 = vunpack.c.h.b16 %v98
    %v581 = vunpack.c.l.b16 %v99
    %v582 = vunpack.c.h.b16 %v99
    %v583 = vunpack.c.l.b16 %v100
    %v584 = vunpack.c.h.b16 %v100
    %v585 = vunpack.c.l.b16 %v101
    %v586 = vunpack.c.h.b16 %v101
    %v587 = vunpack.c.l.b16 %v102
    %v588 = vunpack.c.h.b16 %v102
    %v589 = vunpack.c.l.b16 %v103
    %v590 = vunpack.c.h.b16 %v103
    %v591 = vunpack.c.l.b16 %v104
    %v592 = vunpack.c.h.b16 %v104
    %v593 = vunpack.c.l.b16 %v105
    %v594 = vunpack.c.h.b16 %v105
    %v595 = vunpack.c.l.b16 %v106
    %v596 = vunpack.c.h.b16 %v106
    %v597 = vunpack.c.l.b16 %v107
    %v598 = vunpack.c.h.b16 %v107
    %v599 = vunpack.c.l.b16 %v108
    %v600 = vunpack.c.h.b16 %v108
    %v601 = vunpack.c.l.b16 %v109
    %v602 = vunpack.c.h.b16 %v109
    %v603 = vunpack.c.l.b16 %v110
    %v604 = vunpack.c.h.b16 %v110
    %v605 = vunpack.c.l.b16 %v111
    %v606 = vunpack.c.h.b16 %v111
    %v607 = vunpack.c.l.b16 %v112
    %v608 = vunpack.c.h.b16 %v112
    %v609 = vunpack.c.l.b16 %v113
    %v610 = vunpack.c.h.b16 %v113
    %v611 = vunpack.c.l.b16 %v114
    %v612 = vunpack.c.h.b16 %v114
    %v613 = vunpack.c.l.b16 %v115
    %v614 = vunpack.c.h.b16 %v115
    %v615 = vunpack.c.l.b16 %v116
    %v616 = vunpack.c.h.b16 %v116
    %v617 = vunpack.c.l.b16 %v117
    %v618 = vunpack.c.h.b16 %v117
    %v619 = vunpack.c.l.b16 %v118
    %v620 = vunpack.c.h.b16 %v118
    %v621 = vunpack.c.l.b16 %v119
    %v622 = vunpack.c.h.b16 %v119
    %v623 = vunpack.c.l.b16 %v120
    %v624 = vunpack.c.h.b16 %v120
    %v625 = vunpack.c.l.b16 %v121
    %v626 = vunpack.c.h.b16 %v121
    %v627 = vunpack.c.l.b16 %v122
    %v628 = vunpack.c.h.b16 %v122
    %v629 = vunpack.c.l.b16 %v123
    %v630 = vunpack.c.h.b16 %v123
    %v631 = vunpack.c.l.b16 %v124
    %v632 = vunpack.c.h.b16 %v124
    %v633 = vunpack.c.l.b16 %v125
    %v634 = vunpack.c.h.b16 %v125
    %v635 = vunpack.c.l.b16 %v126
    %v636 = vunpack.c.h.b16 %v126
    %v637 = vunpack.c.l.b16 %v127
    %v638 = vunpack.c.h.b16 %v127
    %v639 = vunpack.c.l.b16 %v128
    %v640 = vunpack.c.h.b16 %v128
    %v641 = vunpack.c.l.b16 %v129
    %v642 = vunpack.c.h.b16 %v129
    %v643 = vunpack.c.l.b16 %v130
    %v644 = vunpack.c.h.b16 %v130
    %v645 = vunpack.c.l.b16 %v131
    %v646 = vunpack.c.h.b16 %v131
    %v647 = vunpack.c.l.b16 %v132
    %v648 = vunpack.c.h.b16 %v132
    %v649 = vunpack.c.l.b16 %v133
    %v650 = vunpack.c.h.b16 %v133
    %v651 = vunpack.c.l.b16 %v134
    %v652 = vunpack.c.h.b16 %v134
    %v653 = vunpack.c.l.b16 %v135
    %v654 = vunpack.c.h.b16 %v135
    %v655 = vunpack.c.l.b16 %v136
    %v656 = vunpack.c.h.b16 %v136
    %v657 = vunpack.c.l.b16 %v137
    %v658 = vunpack.c.h.b16 %v137
    %v659 = vunpack.c.l.b16 %v138
    %v660 = vunpack.c.h.b16 %v138
    %v661 = vunpack.c.l.b16 %v139
    %v662 = vunpack.c.h.b16 %v139
    %v663 = vunpack.c.l.b16 %v140
    %v664 = vunpack.c.h.b16 %v140
    %v665 = vunpack.c.l.b16 %v141
    %v666 = vunpack.c.h.b16 %v141
    %v667 = vunpack.c.l.b16 %v142
    %v668 = vunpack.c.h.b16 %v142
    %v669 = vunpack.c.l.b16 %v143
    %v670 = vunpack.c.h.b16 %v143
    %v671 = vunpack.c.l.b16 %v144
    %v672 = vunpack.c.h.b16 %v144
    %v673 = vunpack.c.l.b16 %v145
    %v674 = vunpack.c.h.b16 %v145
    %v675 = vunpack.c.l.b16 %v146
    %v676 = vunpack.c.h.b16 %v146
    %v677 = vunpack.c.l.b16 %v147
    %v678 = vunpack.c.h.b16 %v147
    %v679 = vunpack.c.l.b16 %v148
    %v680 = vunpack.c.h.b16 %v148
    %v681 = vunpack.c.l.b16 %v149
    %v682 = vunpack.c.h.b16 %v149
    %v683 = vunpack.c.l.b16 %v150
    %v684 = vunpack.c.h.b16 %v150
    %v685 = vunpack.c.l.b16 %v151
    %v686 = vunpack.c.h.b16 %v151
    %v687 = vunpack.c.l.b16 %v152
    %v688 = vunpack.c.h.b16 %v152
    %v689 = vunpack.c.l.b16 %v153
    %v690 = vunpack.c.h.b16 %v153
    %v691 = vunpack.c.l.b16 %v154
    %v692 = vunpack.c.h.b16 %v154
    %v693 = vunpack.c.l.b16 %v155
    %v694 = vunpack.c.h.b16 %v155
    %v695 = vunpack.c.l.b16 %v156
    %v696 = vunpack.c.h.b16 %v156
    %v697 = vunpack.c.l.b16 %v157
    %v698 = vunpack.c.h.b16 %v157
    %v699 = vunpack.c.l.b16 %v158
    %v700 = vunpack.c.h.b16 %v158
    %v701 = vunpack.c.l.b16 %v159
    %v702 = vunpack.c.h.b16 %v159
    %v703 = vunpack.c.l.b16 %v160
    %v704 = vunpack.c.h.b16 %v160
    %v705 = vunpack.c.l.b16 %v161
    %v706 = vunpack.c.h.b16 %v161
    %v707 = vunpack.c.l.b16 %v162
    %v708 = vunpack.c.h.b16 %v162
    %v709 = vunpack.c.l.b16 %v163
    %v710 = vunpack.c.h.b16 %v163
    %v711 = vunpack.c.l.b16 %v164
    %v712 = vunpack.c.h.b16 %v164
    %v713 = vunpack.c.l.b16 %v165
    %v714 = vunpack.c.h.b16 %v165
    %v715 = vunpack.c.l.b16 %v166
    %v716 = vunpack.c.h.b16 %v166
    %v717 = vunpack.c.l.b16 %v167
    %v718 = vunpack.c.h.b16 %v167
    %v719 = vunpack.c.l.b16 %v168
    %v720 = vunpack.c.h.b16 %v168
    %v721 = vunpack.c.l.b16 %v169
    %v722 = vunpack.c.h.b16 %v169
    %v723 = vunpack.c.l.b16 %v170
    %v724 = vunpack.c.h.b16 %v170
    %v725 = vunpack.c.l.b16 %v171
    %v726 = vunpack.c.h.b16 %v171
    %v727 = vunpack.c.l.b16 %v172
    %v728 = vunpack.c.h.b16 %v172
    %v729 = vunpack.c.l.b16 %v173
    %v730 = vunpack.c.h.b16 %v173
    %v731 = vunpack.c.l.b16 %v174
    %v732 = vunpack.c.h.b16 %v174
    %v733 = vunpack.c.l.b16 %v175
    %v734 = vunpack.c.h.b16 %v175
    %v735 = vunpack.c.l.b16 %v176
    %v736 = vunpack.c.h.b16 %v176
    %v737 = vunpack.c.l.b16 %v177
    %v738 = vunpack.c.h.b16 %v177
    %v739 = vunpack.c.l.b16 %v178
    %v740 = vunpack.c.h.b16 %v178
    %v741 = vunpack.c.l.b16 %v179
    %v742 = vunpack.c.h.b16 %v179
    %v743 = vunpack.c.l.b16 %v180
    %v744 = vunpack.c.h.b16 %v180
    %v745 = vunpack.c.l.b16 %v181
    %v746 = vunpack.c.h.b16 %v181
    %v747 = vunpack.c.l.b16 %v182
    %v748 = vunpack.c.h.b16 %v182
    %v749 = vunpack.c.l.b16 %v183
    %v750 = vunpack.c.h.b16 %v183
    %v751 = vunpack.c.l.b16 %v184
    %v752 = vunpack.c.h.b16 %v184
    %v753 = vunpack.c.l.b16 %v185
    %v754 = vunpack.c.h.b16 %v185
    %v755 = vunpack.c.l.b16 %v186
    %v756 = vunpack.c.h.b16 %v186
    %v757 = vunpack.c.l.b16 %v187
    %v758 = vunpack.c.h.b16 %v187
    %v759 = vunpack.c.l.b16 %v188
    %v760 = vunpack.c.h.b16 %v188
    %v761 = vunpack.c.l.b16 %v189
    %v762 = vunpack.c.h.b16 %v189
    %v763 = vunpack.c.l.b16 %v190
    %v764 = vunpack.c.h.b16 %v190
    %v765 = vunpack.c.l.b16 %v191
    %v766 = vunpack.c.h.b16 %v191
    %v767 = vunpack.c.l.b16 %v192
    %v768 = vunpack.c.h.b16 %v192
    %v769 = vunpack.c.l.b16 %v193
    %v770 = vunpack.c.h.b16 %v193
    %v771 = vunpack.c.l.b16 %v194
    %v772 = vunpack.c.h.b16 %v194
    %v773 = vunpack.c.l.b16 %v195
    %v774 = vunpack.c.h.b16 %v195
    %v775 = vunpack.c.l.b16 %v196
    %v776 = vunpack.c.h.b16 %v196
    %v777 = vunpack.c.l.b16 %v197
    %v778 = vunpack.c.h.b16 %v197
    %v779 = vunpack.c.l.b16 %v198
    %v780 = vunpack.c.h.b16 %v198
    %v781 = vunpack.c.l.b16 %v199
    %v782 = vunpack.c.h.b16 %v199
    %v783 = vunpack.c.l.b16 %v200
    %v784 = vunpack.c.h.b16 %v200
    %v785 = vunpack.c.l.b16 %v201
    %v786 = vunpack.c.h.b16 %v201
    %v787 = vunpack.c.l.b16 %v202
    %v788 = vunpack.c.h.b16 %v202
    %v789 = vunpack.c.l.b16 %v203
    %v790 = vunpack.c.h.b16 %v203
    %v791 = vunpack.c.l.b16 %v204
    %v792 = vunpack.c.h.b16 %v204
    %v793 = vunpack.c.l.b16 %v205
    %v794 = vunpack.c.h.b16 %v205
    %v795 = vunpack.c.l.b16 %v206
    %v796 = vunpack.c.h.b16 %v206
    %v797 = vunpack.c.l.b16 %v207
    %v798 = vunpack.c.h.b16 %v207
    %v799 = vunpack.c.l.b16 %v208
    %v800 = vunpack.c.h.b16 %v208
    %v801 = vunpack.c.l.b16 %v209
    %v802 = vunpack.c.h.b16 %v209
    %v803 = vunpack.c.l.b16 %v210
    %v804 = vunpack.c.h.b16 %v210
    %v805 = vunpack.c.l.b16 %v211
    %v806 = vunpack.c.h.b16 %v211
    %v807 = vunpack.c.l.b16 %v212
    %v808 = vunpack.c.h.b16 %v212
    %v809 = vunpack.c.l.b16 %v213
    %v810 = vunpack.c.h.b16 %v213
    %v811 = vunpack.c.l.b16 %v214
    %v812 = vunpack.c.h.b16 %v214
    %v813 = vunpack.c.l.b16 %v215
    %v814 = vunpack.c.h.b16 %v215
    %v815 = vunpack.c.l.b16 %v216
    %v816 = vunpack.c.h.b16 %v216
    %v817 = vunpack.c.l.b16 %v217
    %v818 = vunpack.c.h.b16 %v217
    %v819 = vunpack.c.l.b16 %v218
    %v820 = vunpack.c.h.b16 %v218
    %v821 = vunpack.c.l.b16 %v219
    %v822 = vunpack.c.h.b16 %v219
    %v823 = vunpack.c.l.b16 %v220
    %v824 = vunpack.c.h.b16 %v220
    %v825 = vunpack.c.l.b16 %v221
    %v826 = vunpack.c.h.b16 %v221
    %v827 = vunpack.c.l.b16 %v222
    %v828 = vunpack.c.h.b16 %v222
    %v829 = vunpack.c.l.b16 %v223
    %v830 = vunpack.c.h.b16 %v223
    %v831 = vunpack.c.l.b16 %v224
    %v832 = vunpack.c.h.b16 %v224
    %v833 = vunpack.c.l.b16 %v225
    %v834 = vunpack.c.h.b16 %v225
    %v835 = vunpack.c.l.b16 %v226
    %v836 = vunpack.c.h.b16 %v226
    %v837 = vunpack.c.l.b16 %v227
    %v838 = vunpack.c.h.b16 %v227
    %v839 = vunpack.c.l.b16 %v228
    %v840 = vunpack.c.h.b16 %v228
    %v841 = vunpack.c.l.b16 %v229
    %v842 = vunpack.c.h.b16 %v229
    %v843 = vunpack.c.l.b16 %v230
    %v844 = vunpack.c.h.b16 %v230
    %v845 = vunpack.c.l.b16 %v231
    %v846 = vunpack.c.h.b16 %v231
    %v847 = vunpack.c.l.b16 %v232
    %v848 = vunpack.c.h.b16 %v232
    %v849 = vunpack.c.l.b16 %v233
    %v850 = vunpack.c.h.b16 %v233
    %v851 = vunpack.c.l.b16 %v234
    %v852 = vunpack.c.h.b16 %v234
    %v853 = vunpack.c.l.b16 %v235
    %v854 = vunpack.c.h.b16 %v235
    %v855 = vunpack.c.l.b16 %v236
    %v856 = vunpack.c.h.b16 %v236
    %v857 = vunpack.c.l.b16 %v237
    %v858 = vunpack.c.h.b16 %v237
    %v859 = vunpack.c.l.b16 %v238
    %v860 = vunpack.c.h.b16 %v238
    %v861 = vunpack.c.l.b16 %v239
    %v862 = vunpack.c.h.b16 %v239
    %v863 = vunpack.c.l.b16 %v240
    %v864 = vunpack.c.h.b16 %v240
    %v865 = vunpack.c.l.b16 %v241
    %v866 = vunpack.c.h.b16 %v241
    %v867 = vunpack.c.l.b16 %v242
    %v868 = vunpack.c.h.b16 %v242
    %v869 = vunpack.c.l.b16 %v243
    %v870 = vunpack.c.h.b16 %v243
    %v871 = vunpack.c.l.b16 %v244
    %v872 = vunpack.c.h.b16 %v244
    %v873 = vunpack.c.l.b16 %v245
    %v874 = vunpack.c.h.b16 %v245
    %v875 = vunpack.c.l.b16 %v246
    %v876 = vunpack.c.h.b16 %v246
    %v877 = vunpack.c.l.b16 %v247
    %v878 = vunpack.c.h.b16 %v247
    %v879 = vunpack.c.l.b16 %v248
    %v880 = vunpack.c.h.b16 %v248
    %v881 = vunpack.c.l.b16 %v249
    %v882 = vunpack.c.h.b16 %v249
    %v883 = vunpack.c.l.b16 %v250
    %v884 = vunpack.c.h.b16 %v250
    %v885 = vpack.c.b16 %v509, %v501
    %v886 = vpack.c.b16 %v510, %v502
    %v887 = vpack.c.b16 %v511, %v503
    %v888 = vpack.c.b16 %v512, %v504
    %v889 = vpack.c.b16 %v513, %v505
    %v890 = vpack.c.b16 %v514, %v506
    %v891 = vpack.c.b16 %v515, %v507
    %v892 = vpack.c.b16 %v516, %v508
    %v893 = vpack.c.b16 %v525, %v517
    %v894 = vpack.c.b16 %v526, %v518
    %v895 = vpack.c.b16 %v527, %v519
    %v896 = vpack.c.b16 %v528, %v520
    %v897 = vpack.c.b16 %v529, %v521
    %v898 = vpack.c.b16 %v530, %v522
    %v899 = vpack.c.b16 %v531, %v523
    %v900 = vpack.c.b16 %v532, %v524
    %v901 = vpack.c.b16 %v541, %v533
    %v902 = vpack.c.b16 %v542, %v534
    %v903 = vpack.c.b16 %v543, %v535
    %v904 = vpack.c.b16 %v544, %v536
    %v905 = vpack.c.b16 %v545, %v537
    %v906 = vpack.c.b16 %v546, %v538
    %v907 = vpack.c.b16 %v547, %v539
    %v908 = vpack.c.b16 %v548, %v540
    %v909 = vpack.c.b16 %v557, %v549
    %v910 = vpack.c.b16 %v558, %v550
    %v911 = vpack.c.b16 %v559, %v551
    %v912 = vpack.c.b16 %v560, %v552
    %v913 = vpack.c.b16 %v561, %v553
    %v914 = vpack.c.b16 %v562, %v554
    %v915 = vpack.c.b16 %v563, %v555
    %v916 = vpack.c.b16 %v564, %v556
    %v917 = vpack.c.b16 %v573, %v565
    %v918 = vpack.c.b16 %v574, %v566
    %v919 = vpack.c.b16 %v575, %v567
    %v920 = vpack.c.b16 %v576, %v568
    %v921 = vpack.c.b16 %v577, %v569
    %v922 = vpack.c.b16 %v578, %v570
    %v923 = vpack.c.b16 %v579, %v571
    %v924 = vpack.c.b16 %v580, %v572
    %v925 = vpack.c.b16 %v589, %v581
    %v926 = vpack.c.b16 %v590, %v582
    %v927 = vpack.c.b16 %v591, %v583
    %v928 = vpack.c.b16 %v592, %v584
    %v929 = vpack.c.b16 %v593, %v585
    %v930 = vpack.c.b16 %v594, %v586
    %v931 = vpack.c.b16 %v595, %v587
    %v932 = vpack.c.b16 %v596, %v588
    %v933 = vpack.c.b16 %v605, %v597
    %v934 = vpack.c.b16 %v606, %v598
    %v935 = vpack.c.b16 %v607, %v599
    %v936 = vpack.c.b16 %v608, %v600
    %v937 = vpack.c.b16 %v609, %v601
    %v938 = vpack.c.b16 %v610, %v602
    %v939 = vpack.c.b16 %v611, %v603
    %v940 = vpack.c.b16 %v612, %v604
    %v941 = vpack.c.b16 %v621, %v613
    %v942 = vpack.c.b16 %v622, %v614
    %v943 = vpack.c.b16 %v623, %v615
    %v944 = vpack.c.b16 %v624, %v616
    %v945 = vpack.c.b16 %v625, %v617
    %v946 = vpack.c.b16 %v626, %v618
    %v947 = vpack.c.b16 %v627, %v619
    %v948 = vpack.c.b16 %v628, %v620
    %v949 = vpack.c.b16 %v637, %v629
    %v950 = vpack.c.b16 %v638, %v630
    %v951 = vpack.c.b16 %v639, %v631
    %v952 = vpack.c.b16 %v640, %v632
    %v953 = vpack.c.b16 %v641, %v633
    %v954 = vpack.c.b16 %v642, %v634
    %v955 = vpack.c.b16 %v643, %v635
    %v956 = vpack.c.b16 %v644, %v636
    %v957 = vpack.c.b16 %v653, %v645
    %v958 = vpack.c.b16 %v654, %v646
    %v959 = vpack.c.b16 %v655, %v647
    %v960 = vpack.c.b16 %v656, %v648
    %v961 = vpack.c.b16 %v657, %v649
    %v962 = vpack.c.b16 %v658, %v650
    %v963 = vpack.c.b16 %v659, %v651
    %v964 = vpack.c.b16 %v660, %v652
    %v965 = vpack.c.b16 %v669, %v661
    %v966 = vpack.c.b16 %v670, %v662
    %v967 = vpack.c.b16 %v671, %v663
    %v968 = vpack.c.b16 %v672, %v664
    %v969 = vpack.c.b16 %v673, %v665
    %v970 = vpack.c.b16 %v674, %v666
    %v971 = vpack.c.b16 %v675, %v667
    %v972 = vpack.c.b16 %v676, %v668
    %v973 = vpack.c.b16 %v685, %v677
    %v974 = vpack.c.b16 %v686, %v678
    %v975 = vpack.c.b16 %v687, %v679
    %v976 = vpack.c.b16 %v688, %v680
    %v977 = vpack.c.b16 %v689, %v681
    %v978 = vpack.c.b16 %v690, %v682
    %v979 = vpack.c.b16 %v691, %v683
    %v980 = vpack.c.b16 %v692, %v684
    %v981 = vpack.c.b16 %v701, %v693
    %v982 = vpack.c.b16 %v702, %v694
    %v983 = vpack.c.b16 %v703, %v695
    %v984 = vpack.c.b16 %v704, %v696
    %v985 = vpack.c.b16 %v705, %v697
    %v986 = vpack.c.b16 %v706, %v698
    %v987 = vpack.c.b16 %v707, %v699
    %v988 = vpack.c.b16 %v708, %v700
    %v989 = vpack.c.b16 %v717, %v709
    %v990 = vpack.c.b16 %v718, %v710
    %v991 = vpack.c.b16 %v719, %v711
    %v992 = vpack.c.b16 %v720, %v712
    %v993 = vpack.c.b16 %v721, %v713
    %v994 = vpack.c.b16 %v722, %v714
    %v995 = vpack.c.b16 %v723, %v715
    %v996 = vpack.c.b16 %v724, %v716
    %v997 = vpack.c.b16 %v733, %v725
    %v998 = vpack.c.b16 %v734, %v726
    %v999 = vpack.c.b16 %v735, %v727
    %v1000 = vpack.c.b16 %v736, %v728
    %v1001 = vpack.c.b16 %v737, %v729
    %v1002 = vpack.c.b16 %v738, %v730
    %v1003 = vpack.c.b16 %v739, %v731
    %v1004 = vpack.c.b16 %v740, %v732
    %v1005 = vpack.c.b16 %v749, %v741
    %v1006 = vpack.c.b16 %v750, %v742
    %v1007 = vpack.c.b16 %v751, %v743
    %v1008 = vpack.c.b16 %v752, %v744
    %v1009 = vpack.c.b16 %v753, %v745
    %v1010 = vpack.c.b16 %v754, %v746
    %v1011 = vpack.c.b16 %v755, %v747
    %v1012 = vpack.c.b16 %v756, %v748
    %v1013 = vpack.c.b16 %v765, %v757
    %v1014 = vpack.c.b16 %v766, %v758
    %v1015 = vpack.c.b16 %v767, %v759
    %v1016 = vpack.c.b16 %v768, %v760
    %v1017 = vpack.c.b16 %v769, %v761
    %v1018 = vpack.c.b16 %v770, %v762
    %v1019 = vpack.c.b16 %v771, %v763
    %v1020 = vpack.c.b16 %v772, %v764
    %v1021 = vpack.c.b16 %v781, %v773
    %v1022 = vpack.c.b16 %v782, %v774
    %v1023 = vpack.c.b16 %v783, %v775
    %v1024 = vpack.c.b16 %v784, %v776
    %v1025 = vpack.c.b16 %v785, %v777
    %v1026 = vpack.c.b16 %v786, %v778
    %v1027 = vpack.c.b16 %v787, %v779
    %v1028 = vpack.c.b16 %v788, %v780
    %v1029 = vpack.c.b16 %v797, %v789
    %v1030 = vpack.c.b16 %v798, %v790
    %v1031 = vpack.c.b16 %v799, %v791
    %v1032 = vpack.c.b16 %v800, %v792
    %v1033 = vpack.c.b16 %v801, %v793
    %v1034 = vpack.c.b16 %v802, %v794
    %v1035 = vpack.c.b16 %v803, %v795
    %v1036 = vpack.c.b16 %v804, %v796
    %v1037 = vpack.c.b16 %v813, %v805
    %v1038 = vpack.c.b16 %v814, %v806
    %v1039 = vpack.c.b16 %v815, %v807
    %v1040 = vpack.c.b16 %v816, %v808
    %v1041 = vpack.c.b16 %v817, %v809
    %v1042 = vpack.c.b16 %v818, %v810
    %v1043 = vpack.c.b16 %v819, %v811
    %v1044 = vpack.c.b16 %v820, %v812
    %v1045 = vpack.c.b16 %v829, %v821
    %v1046 = vpack.c.b16 %v830, %v822
    %v1047 = vpack.c.b16 %v831, %v823
    %v1048 = vpack.c.b16 %v832, %v824
    %v1049 = vpack.c.b16 %v833, %v825
    %v1050 = vpack.c.b16 %v834, %v826
    %v1051 = vpack.c.b16 %v835, %v827
    %v1052 = vpack.c.b16 %v836, %v828
    %v1053 = vpack.c.b16 %v845, %v837
    %v1054 = vpack.c.b16 %v846, %v838
    %v1055 = vpack.c.b16 %v847, %v839
    %v1056 = vpack.c.b16 %v848, %v840
    %v1057 = vpack.c.b16 %v849, %v841
    %v1058 = vpack.c.b16 %v850, %v842
    %v1059 = vpack.c.b16 %v851, %v843
    %v1060 = vpack.c.b16 %v852, %v844
    %v1061 = vpack.c.b16 %v861, %v853
    %v1062 = vpack.c.b16 %v862, %v854
    %v1063 = vpack.c.b16 %v863, %v855
    %v1064 = vpack.c.b16 %v864, %v856
    %v1065 = vpack.c.b16 %v865, %v857
    %v1066 = vpack.c.b16 %v866, %v858
    %v1067 = vpack.c.b16 %v867, %v859
    %v1068 = vpack.c.b16 %v868, %v860
    %v1069 = vpack.c.b16 %v877, %v869
    %v1070 = vpack.c.b16 %v878, %v870
    %v1071 = vpack.c.b16 %v879, %v871
    %v1072 = vpack.c.b16 %v880, %v872
    %v1073 = vpack.c.b16 %v881, %v873
    %v1074 = vpack.c.b16 %v882, %v874
    %v1075 = vpack.c.b16 %v883, %v875
    %v1076 = vpack.c.b16 %v884, %v876
    %1269 = vmatprep.subr.bf16.mxu0 %v886
    %1270 = vmatpush1.bf16.msra.mxu0 %v885
    %1271 = vmatprep.subr.bf16.mxu0 %v894
    %1272 = vmatpush1.bf16.msra.mxu0 %v893
    %1273 = vmatprep.subr.bf16.mxu0 %v902
    %1274 = vmatpush1.bf16.msra.mxu0 %v901
    %1275 = vmatprep.subr.bf16.mxu0 %v910
    %1276 = vmatpush1.bf16.msra.mxu0 %v909
    %1277 = vmatprep.subr.bf16.mxu0 %v918
    %1278 = vmatpush1.bf16.msra.mxu0 %v917
    %1279 = vmatprep.subr.bf16.mxu0 %v926
    %1280 = vmatpush1.bf16.msra.mxu0 %v925
    %1281 = vmatprep.subr.bf16.mxu0 %v934
    %1282 = vmatpush1.bf16.msra.mxu0 %v933
    %1283 = vmatprep.subr.bf16.mxu0 %v942
    %1284 = vmatpush1.bf16.msra.mxu0 %v941
    %1285 = vmatprep.subr.bf16.mxu0 %v950
    %1286 = vmatpush1.bf16.msra.mxu0 %v949
    %1287 = vmatprep.subr.bf16.mxu0 %v958
    %1288 = vmatpush1.bf16.msra.mxu0 %v957
    %1289 = vmatprep.subr.bf16.mxu0 %v966
    %1290 = vmatpush1.bf16.msra.mxu0 %v965
    %1291 = vmatprep.subr.bf16.mxu0 %v974
    %1292 = vmatpush1.bf16.msra.mxu0 %v973
    %1293 = vmatprep.subr.bf16.mxu0 %v982
    %1294 = vmatpush1.bf16.msra.mxu0 %v981
    %1295 = vmatprep.subr.bf16.mxu0 %v990
    %1296 = vmatpush1.bf16.msra.mxu0 %v989
    %1297 = vmatprep.subr.bf16.mxu0 %v998
    %1298 = vmatpush1.bf16.msra.mxu0 %v997
    %1299 = vmatprep.subr.bf16.mxu0 %v1006
    %1300 = vmatpush1.bf16.msra.mxu0 %v1005
    %1301 = vmatprep.mubr.bf16.mxu0 %v304
    %1302 = vmatmul.mubr.bf16.gmra.mrb[0].mxu0 %v303
    %v1303 = vpop.f32.mrb[0].mxu0
    %v1304 = vadd.f32 %v256, %v1303
    %v1305 = vpop.f32.mrb[0].mxu0
    %v1306 = vadd.f32 %v260, %v1305
    %v1307 = vpop.f32.mrb[0].mxu0
    %v1308 = vadd.f32 %v256, %v1307
    %v1309 = vpop.f32.mrb[0].mxu0
    %v1310 = vadd.f32 %v260, %v1309
    %1311 = vdwg.mxu0
    %1312 = vmatprep.subr.bf16.mxu0 %v1014
    %1313 = vmatpush1.bf16.msra.mxu0 %v1013
    %1314 = vmatprep.subr.bf16.mxu0 %v1022
    %1315 = vmatpush1.bf16.msra.mxu0 %v1021
    %1316 = vmatprep.subr.bf16.mxu0 %v1030
    %1317 = vmatpush1.bf16.msra.mxu0 %v1029
    %1318 = vmatprep.subr.bf16.mxu0 %v1038
    %1319 = vmatpush1.bf16.msra.mxu0 %v1037
    %1320 = vmatprep.subr.bf16.mxu0 %v1046
    %1321 = vmatpush1.bf16.msra.mxu0 %v1045
    %1322 = vmatprep.subr.bf16.mxu0 %v1054
    %1323 = vmatpush1.bf16.msra.mxu0 %v1053
    %1324 = vmatprep.subr.bf16.mxu0 %v1062
    %1325 = vmatpush1.bf16.msra.mxu0 %v1061
    %1326 = vmatprep.subr.bf16.mxu0 %v1070
    %1327 = vmatpush1.bf16.msra.mxu0 %v1069
    %1328 = vmatprep.subr.bf16.mxu0 0
    %1329 = vmatpush1.bf16.msra.mxu0 0
    %1330 = vmatprep.subr.bf16.mxu0 0
    %1331 = vmatpush1.bf16.msra.mxu0 0
    %1332 = vmatprep.subr.bf16.mxu0 0
    %1333 = vmatpush1.bf16.msra.mxu0 0
    %1334 = vmatprep.subr.bf16.mxu0 0
    %1335 = vmatpush1.bf16.msra.mxu0 0
    %1336 = vmatprep.subr.bf16.mxu0 0
    %1337 = vmatpush1.bf16.msra.mxu0 0
    %1338 = vmatprep.subr.bf16.mxu0 0
    %1339 = vmatpush1.bf16.msra.mxu0 0
    %1340 = vmatprep.subr.bf16.mxu0 0
    %1341 = vmatpush1.bf16.msra.mxu0 0
    %1342 = vmatprep.subr.bf16.mxu0 0
    %1343 = vmatpush1.bf16.msra.mxu0 0
    %1344 = vmatprep.mubr.bf16.mxu0 0
    %1345 = vmatmul.mubr.bf16.gmra.mrb[0].mxu0 %v305
    %v1346 = vpop.f32.mrb[0].mxu0
    %v1347 = vadd.f32 %v1304, %v1346
    %v1348 = vpop.f32.mrb[0].mxu0
    %v1349 = vadd.f32 %v1306, %v1348
    %v1350 = vpop.f32.mrb[0].mxu0
    %v1351 = vadd.f32 %v1308, %v1350
    %v1352 = vpop.f32.mrb[0].mxu0
    %v1353 = vadd.f32 %v1310, %v1352
    %1354 = vdwg.mxu0
    %1355 = vmatprep.subr.bf16.mxu0 %v888
    %1356 = vmatpush1.bf16.msra.mxu0 %v887
    %1357 = vmatprep.subr.bf16.mxu0 %v896
    %1358 = vmatpush1.bf16.msra.mxu0 %v895
    %1359 = vmatprep.subr.bf16.mxu0 %v904
    %1360 = vmatpush1.bf16.msra.mxu0 %v903
    %1361 = vmatprep.subr.bf16.mxu0 %v912
    %1362 = vmatpush1.bf16.msra.mxu0 %v911
    %1363 = vmatprep.subr.bf16.mxu0 %v920
    %1364 = vmatpush1.bf16.msra.mxu0 %v919
    %1365 = vmatprep.subr.bf16.mxu0 %v928
    %1366 = vmatpush1.bf16.msra.mxu0 %v927
    %1367 = vmatprep.subr.bf16.mxu0 %v936
    %1368 = vmatpush1.bf16.msra.mxu0 %v935
    %1369 = vmatprep.subr.bf16.mxu0 %v944
    %1370 = vmatpush1.bf16.msra.mxu0 %v943
    %1371 = vmatprep.subr.bf16.mxu0 %v952
    %1372 = vmatpush1.bf16.msra.mxu0 %v951
    %1373 = vmatprep.subr.bf16.mxu0 %v960
    %1374 = vmatpush1.bf16.msra.mxu0 %v959
    %1375 = vmatprep.subr.bf16.mxu0 %v968
    %1376 = vmatpush1.bf16.msra.mxu0 %v967
    %1377 = vmatprep.subr.bf16.mxu0 %v976
    %1378 = vmatpush1.bf16.msra.mxu0 %v975
    %1379 = vmatprep.subr.bf16.mxu0 %v984
    %1380 = vmatpush1.bf16.msra.mxu0 %v983
    %1381 = vmatprep.subr.bf16.mxu0 %v992
    %1382 = vmatpush1.bf16.msra.mxu0 %v991
    %1383 = vmatprep.subr.bf16.mxu0 %v1000
    %1384 = vmatpush1.bf16.msra.mxu0 %v999
    %1385 = vmatprep.subr.bf16.mxu0 %v1008
    %1386 = vmatpush1.bf16.msra.mxu0 %v1007
    %1387 = vmatprep.mubr.bf16.mxu0 %v304
    %1388 = vmatmul.mubr.bf16.gmra.mrb[0].mxu0 %v303
    %v1389 = vpop.f32.mrb[0].mxu0
    %v1390 = vadd.f32 %v264, %v1389
    %v1391 = vpop.f32.mrb[0].mxu0
    %v1392 = vadd.f32 %v268, %v1391
    %v1393 = vpop.f32.mrb[0].mxu0
    %v1394 = vadd.f32 %v264, %v1393
    %v1395 = vpop.f32.mrb[0].mxu0
    %v1396 = vadd.f32 %v268, %v1395
    %1397 = vdwg.mxu0
    %1398 = vmatprep.subr.bf16.mxu0 %v1016
    %1399 = vmatpush1.bf16.msra.mxu0 %v1015
    %1400 = vmatprep.subr.bf16.mxu0 %v1024
    %1401 = vmatpush1.bf16.msra.mxu0 %v1023
    %1402 = vmatprep.subr.bf16.mxu0 %v1032
    %1403 = vmatpush1.bf16.msra.mxu0 %v1031
    %1404 = vmatprep.subr.bf16.mxu0 %v1040
    %1405 = vmatpush1.bf16.msra.mxu0 %v1039
    %1406 = vmatprep.subr.bf16.mxu0 %v1048
    %1407 = vmatpush1.bf16.msra.mxu0 %v1047
    %1408 = vmatprep.subr.bf16.mxu0 %v1056
    %1409 = vmatpush1.bf16.msra.mxu0 %v1055
    %1410 = vmatprep.subr.bf16.mxu0 %v1064
    %1411 = vmatpush1.bf16.msra.mxu0 %v1063
    %1412 = vmatprep.subr.bf16.mxu0 %v1072
    %1413 = vmatpush1.bf16.msra.mxu0 %v1071
    %1414 = vmatprep.subr.bf16.mxu0 0
    %1415 = vmatpush1.bf16.msra.mxu0 0
    %1416 = vmatprep.subr.bf16.mxu0 0
    %1417 = vmatpush1.bf16.msra.mxu0 0
    %1418 = vmatprep.subr.bf16.mxu0 0
    %1419 = vmatpush1.bf16.msra.mxu0 0
    %1420 = vmatprep.subr.bf16.mxu0 0
    %1421 = vmatpush1.bf16.msra.mxu0 0
    %1422 = vmatprep.subr.bf16.mxu0 0
    %1423 = vmatpush1.bf16.msra.mxu0 0
    %1424 = vmatprep.subr.bf16.mxu0 0
    %1425 = vmatpush1.bf16.msra.mxu0 0
    %1426 = vmatprep.subr.bf16.mxu0 0
    %1427 = vmatpush1.bf16.msra.mxu0 0
    %1428 = vmatprep.subr.bf16.mxu0 0
    %1429 = vmatpush1.bf16.msra.mxu0 0
    %1430 = vmatprep.mubr.bf16.mxu0 0
    %1431 = vmatmul.mubr.bf16.gmra.mrb[0].mxu0 %v305
    %v1432 = vpop.f32.mrb[0].mxu0
    %v1433 = vadd.f32 %v1390, %v1432
    %v1434 = vpop.f32.mrb[0].mxu0
    %v1435 = vadd.f32 %v1392, %v1434
    %v1436 = vpop.f32.mrb[0].mxu0
    %v1437 = vadd.f32 %v1394, %v1436
    %v1438 = vpop.f32.mrb[0].mxu0
    %v1439 = vadd.f32 %v1396, %v1438
    %1440 = vdwg.mxu0
    %1441 = vmatprep.subr.bf16.mxu0 %v890
    %1442 = vmatpush1.bf16.msra.mxu0 %v889
    %1443 = vmatprep.subr.bf16.mxu0 %v898
    %1444 = vmatpush1.bf16.msra.mxu0 %v897
    %1445 = vmatprep.subr.bf16.mxu0 %v906
    %1446 = vmatpush1.bf16.msra.mxu0 %v905
    %1447 = vmatprep.subr.bf16.mxu0 %v914
    %1448 = vmatpush1.bf16.msra.mxu0 %v913
    %1449 = vmatprep.subr.bf16.mxu0 %v922
    %1450 = vmatpush1.bf16.msra.mxu0 %v921
    %1451 = vmatprep.subr.bf16.mxu0 %v930
    %1452 = vmatpush1.bf16.msra.mxu0 %v929
    %1453 = vmatprep.subr.bf16.mxu0 %v938
    %1454 = vmatpush1.bf16.msra.mxu0 %v937
    %1455 = vmatprep.subr.bf16.mxu0 %v946
    %1456 = vmatpush1.bf16.msra.mxu0 %v945
    %1457 = vmatprep.subr.bf16.mxu0 %v954
    %1458 = vmatpush1.bf16.msra.mxu0 %v953
    %1459 = vmatprep.subr.bf16.mxu0 %v962
    %1460 = vmatpush1.bf16.msra.mxu0 %v961
    %1461 = vmatprep.subr.bf16.mxu0 %v970
    %1462 = vmatpush1.bf16.msra.mxu0 %v969
    %1463 = vmatprep.subr.bf16.mxu0 %v978
    %1464 = vmatpush1.bf16.msra.mxu0 %v977
    %1465 = vmatprep.subr.bf16.mxu0 %v986
    %1466 = vmatpush1.bf16.msra.mxu0 %v985
    %1467 = vmatprep.subr.bf16.mxu0 %v994
    %1468 = vmatpush1.bf16.msra.mxu0 %v993
    %1469 = vmatprep.subr.bf16.mxu0 %v1002
    %1470 = vmatpush1.bf16.msra.mxu0 %v1001
    %1471 = vmatprep.subr.bf16.mxu0 %v1010
    %1472 = vmatpush1.bf16.msra.mxu0 %v1009
    %1473 = vmatprep.mubr.bf16.mxu0 %v304
    %1474 = vmatmul.mubr.bf16.gmra.mrb[0].mxu0 %v303
    %v1475 = vpop.f32.mrb[0].mxu0
    %v1476 = vadd.f32 %v272, %v1475
    %v1477 = vpop.f32.mrb[0].mxu0
    %v1478 = vadd.f32 %v276, %v1477
    %v1479 = vpop.f32.mrb[0].mxu0
    %v1480 = vadd.f32 %v272, %v1479
    %v1481 = vpop.f32.mrb[0].mxu0
    %v1482 = vadd.f32 %v276, %v1481
    %1483 = vdwg.mxu0
    %1484 = vmatprep.subr.bf16.mxu0 %v1018
    %1485 = vmatpush1.bf16.msra.mxu0 %v1017
    %1486 = vmatprep.subr.bf16.mxu0 %v1026
    %1487 = vmatpush1.bf16.msra.mxu0 %v1025
    %1488 = vmatprep.subr.bf16.mxu0 %v1034
    %1489 = vmatpush1.bf16.msra.mxu0 %v1033
    %1490 = vmatprep.subr.bf16.mxu0 %v1042
    %1491 = vmatpush1.bf16.msra.mxu0 %v1041
    %1492 = vmatprep.subr.bf16.mxu0 %v1050
    %1493 = vmatpush1.bf16.msra.mxu0 %v1049
    %1494 = vmatprep.subr.bf16.mxu0 %v1058
    %1495 = vmatpush1.bf16.msra.mxu0 %v1057
    %1496 = vmatprep.subr.bf16.mxu0 %v1066
    %1497 = vmatpush1.bf16.msra.mxu0 %v1065
    %1498 = vmatprep.subr.bf16.mxu0 %v1074
    %1499 = vmatpush1.bf16.msra.mxu0 %v1073
    %1500 = vmatprep.subr.bf16.mxu0 0
    %1501 = vmatpush1.bf16.msra.mxu0 0
    %1502 = vmatprep.subr.bf16.mxu0 0
    %1503 = vmatpush1.bf16.msra.mxu0 0
    %1504 = vmatprep.subr.bf16.mxu0 0
    %1505 = vmatpush1.bf16.msra.mxu0 0
    %1506 = vmatprep.subr.bf16.mxu0 0
    %1507 = vmatpush1.bf16.msra.mxu0 0
    %1508 = vmatprep.subr.bf16.mxu0 0
    %1509 = vmatpush1.bf16.msra.mxu0 0
    %1510 = vmatprep.subr.bf16.mxu0 0
    %1511 = vmatpush1.bf16.msra.mxu0 0
    %1512 = vmatprep.subr.bf16.mxu0 0
    %1513 = vmatpush1.bf16.msra.mxu0 0
    %1514 = vmatprep.subr.bf16.mxu0 0
    %1515 = vmatpush1.bf16.msra.mxu0 0
    %1516 = vmatprep.mubr.bf16.mxu0 0
    %1517 = vmatmul.mubr.bf16.gmra.mrb[0].mxu0 %v305
    %v1518 = vpop.f32.mrb[0].mxu0
    %v1519 = vadd.f32 %v1476, %v1518
    %v1520 = vpop.f32.mrb[0].mxu0
    %v1521 = vadd.f32 %v1478, %v1520
    %v1522 = vpop.f32.mrb[0].mxu0
    %v1523 = vadd.f32 %v1480, %v1522
    %v1524 = vpop.f32.mrb[0].mxu0
    %v1525 = vadd.f32 %v1482, %v1524
    %1526 = vdwg.mxu0
    %1527 = vmatprep.subr.bf16.mxu0 %v892
    %1528 = vmatpush1.bf16.msra.mxu0 %v891
    %1529 = vmatprep.subr.bf16.mxu0 %v900
    %1530 = vmatpush1.bf16.msra.mxu0 %v899
    %1531 = vmatprep.subr.bf16.mxu0 %v908
    %1532 = vmatpush1.bf16.msra.mxu0 %v907
    %1533 = vmatprep.subr.bf16.mxu0 %v916
    %1534 = vmatpush1.bf16.msra.mxu0 %v915
    %1535 = vmatprep.subr.bf16.mxu0 %v924
    %1536 = vmatpush1.bf16.msra.mxu0 %v923
    %1537 = vmatprep.subr.bf16.mxu0 %v932
    %1538 = vmatpush1.bf16.msra.mxu0 %v931
    %1539 = vmatprep.subr.bf16.mxu0 %v940
    %1540 = vmatpush1.bf16.msra.mxu0 %v939
    %1541 = vmatprep.subr.bf16.mxu0 %v948
    %1542 = vmatpush1.bf16.msra.mxu0 %v947
    %1543 = vmatprep.subr.bf16.mxu0 %v956
    %1544 = vmatpush1.bf16.msra.mxu0 %v955
    %1545 = vmatprep.subr.bf16.mxu0 %v964
    %1546 = vmatpush1.bf16.msra.mxu0 %v963
    %1547 = vmatprep.subr.bf16.mxu0 %v972
    %1548 = vmatpush1.bf16.msra.mxu0 %v971
    %1549 = vmatprep.subr.bf16.mxu0 %v980
    %1550 = vmatpush1.bf16.msra.mxu0 %v979
    %1551 = vmatprep.subr.bf16.mxu0 %v988
    %1552 = vmatpush1.bf16.msra.mxu0 %v987
    %1553 = vmatprep.subr.bf16.mxu0 %v996
    %1554 = vmatpush1.bf16.msra.mxu0 %v995
    %1555 = vmatprep.subr.bf16.mxu0 %v1004
    %1556 = vmatpush1.bf16.msra.mxu0 %v1003
    %1557 = vmatprep.subr.bf16.mxu0 %v1012
    %1558 = vmatpush1.bf16.msra.mxu0 %v1011
    %1559 = vmatprep.mubr.bf16.mxu0 %v304
    %1560 = vmatmul.mubr.bf16.gmra.mrb[0].mxu0 %v303
    %v1561 = vpop.f32.mrb[0].mxu0
    %v1562 = vadd.f32 %v280, %v1561
    %v1563 = vpop.f32.mrb[0].mxu0
    %v1564 = vadd.f32 %v284, %v1563
    %v1565 = vpop.f32.mrb[0].mxu0
    %v1566 = vadd.f32 %v280, %v1565
    %v1567 = vpop.f32.mrb[0].mxu0
    %v1568 = vadd.f32 %v284, %v1567
    %1569 = vdwg.mxu0
    %1570 = vmatprep.subr.bf16.mxu0 %v1020
    %1571 = vmatpush1.bf16.msra.mxu0 %v1019
    %1572 = vmatprep.subr.bf16.mxu0 %v1028
    %1573 = vmatpush1.bf16.msra.mxu0 %v1027
    %1574 = vmatprep.subr.bf16.mxu0 %v1036
    %1575 = vmatpush1.bf16.msra.mxu0 %v1035
    %1576 = vmatprep.subr.bf16.mxu0 %v1044
    %1577 = vmatpush1.bf16.msra.mxu0 %v1043
    %1578 = vmatprep.subr.bf16.mxu0 %v1052
    %1579 = vmatpush1.bf16.msra.mxu0 %v1051
    %1580 = vmatprep.subr.bf16.mxu0 %v1060
    %1581 = vmatpush1.bf16.msra.mxu0 %v1059
    %1582 = vmatprep.subr.bf16.mxu0 %v1068
    %1583 = vmatpush1.bf16.msra.mxu0 %v1067
    %1584 = vmatprep.subr.bf16.mxu0 %v1076
    %1585 = vmatpush1.bf16.msra.mxu0 %v1075
    %1586 = vmatprep.subr.bf16.mxu0 0
    %1587 = vmatpush1.bf16.msra.mxu0 0
    %1588 = vmatprep.subr.bf16.mxu0 0
    %1589 = vmatpush1.bf16.msra.mxu0 0
    %1590 = vmatprep.subr.bf16.mxu0 0
    %1591 = vmatpush1.bf16.msra.mxu0 0
    %1592 = vmatprep.subr.bf16.mxu0 0
    %1593 = vmatpush1.bf16.msra.mxu0 0
    %1594 = vmatprep.subr.bf16.mxu0 0
    %1595 = vmatpush1.bf16.msra.mxu0 0
    %1596 = vmatprep.subr.bf16.mxu0 0
    %1597 = vmatpush1.bf16.msra.mxu0 0
    %1598 = vmatprep.subr.bf16.mxu0 0
    %1599 = vmatpush1.bf16.msra.mxu0 0
    %1600 = vmatprep.subr.bf16.mxu0 0
    %1601 = vmatpush1.bf16.msra.mxu0 0
    %1602 = vmatprep.mubr.bf16.mxu0 0
    %1603 = vmatmul.mubr.bf16.gmra.mrb[0].mxu0 %v305
    %v1604 = vpop.f32.mrb[0].mxu0
    %v1605 = vadd.f32 %v1562, %v1604
    %v1606 = vpop.f32.mrb[0].mxu0
    %v1607 = vadd.f32 %v1564, %v1606
    %v1608 = vpop.f32.mrb[0].mxu0
    %v1609 = vadd.f32 %v1566, %v1608
    %v1610 = vpop.f32.mrb[0].mxu0
    %v1611 = vadd.f32 %v1568, %v1610
    %1612 = vdwg.mxu0
    %1613 = vst [vmem:[#allocation8] sm:$0xff] %v1347
    %1614 = vst [vmem:[#allocation8 + $0x8] sm:$0xff] %v1349
    %1615 = vst [vmem:[#allocation8 + $0x10] sm:$0xff] %v1433
    %1616 = vst [vmem:[#allocation8 + $0x18] sm:$0xff] %v1435
    %1617 = vst [vmem:[#allocation8 + $0x20] sm:$0xff] %v1519
    %1618 = vst [vmem:[#allocation8 + $0x28] sm:$0xff] %v1521
    %1619 = vst [vmem:[#allocation8 + $0x30] sm:$0xff] %v1605
    %1620 = vst [vmem:[#allocation8 + $0x38] sm:$0xff] %v1607
    %1621 = vst [vmem:[#allocation8 + $0x40] sm:$0xff] %v1351
    %1622 = vst [vmem:[#allocation8 + $0x48] sm:$0xff] %v1353
    %1623 = vst [vmem:[#allocation8 + $0x50] sm:$0xff] %v1437
    %1624 = vst [vmem:[#allocation8 + $0x58] sm:$0xff] %v1439
    %1625 = vst [vmem:[#allocation8 + $0x60] sm:$0xff] %v1523
    %1626 = vst [vmem:[#allocation8 + $0x68] sm:$0xff] %v1525
    %1627 = vst [vmem:[#allocation8 + $0x70] sm:$0xff] %v1609
    %1628 = vst [vmem:[#allocation8 + $0x78] sm:$0xff] %v1611
    // Predicated region
    $region26: #{tpu_custom_call.1} parent=1 // pred_check
      _
    $region27: #{tpu_custom_call.1} parent=1 // pred_check_branch
      %1630 = sbr.rel (0) target = $region29
    $region28: #{tpu_custom_call.1} parent=1 // pred_region
      %s1632 = ssub.s32 2048, 2048
      %1633 = vsyncadd [#allocation4], %s1632
      %s1634 = sshll.u32 [#allocation8], 4
      %s1635 = int_to_ptr.vmem [resolvable:$true] %s1634
      %1640 = dma.vmem_to_hbm [thread:$0]  %s1635, 2048, %s3, [#allocation4], 1024, 1024, 64
    $region29: #{tpu_custom_call.1} parent=1 // pred_fallthru
      _
    // Predicated region
    $region30: #{tpu_custom_call.1} parent=1 // pred_check
      _
    $region31: #{tpu_custom_call.1} parent=1 // pred_check_branch
      %1642 = sbr.rel (0) target = $region33
    $region32: #{tpu_custom_call.1} parent=1 // pred_region
      %1643 = dma.done [#allocation4], 2048
    $region33: #{tpu_custom_call.1} parent=1 // pred_fallthru
      _
    %1644 = vsyncpa [#allocation3], 1
    %1645 = vsyncpa [#allocation6], 1
    %1646 = vsyncpa [#allocation4], 1

</llo_original>
